<compile_context>
chip_gen: v5e
topology: v5e:2x2
jax: 0.10.0
libtpu: 0.0.40
codegen_flags: <defaults>
</compile_context>

<pallas_src>
import functools

import jax
import jax.numpy as jnp
from jax import lax
from jax.experimental import pallas as pl
from jax.experimental.pallas import tpu as pltpu

SMOOTH = 1.0
GAMMA = 0.0
TEMPERATURE = 1.0


def _softdice_partial_kernel(logits_ref, target_ref, inter_ref, union_ref, *,
                             gamma, temperature, n_total, tile_n,
                             tiles_per_part):
    t = pl.program_id(1)

    @pl.when(t == 0)
    def _init():
        inter_ref[...] = jnp.zeros_like(inter_ref)
        union_ref[...] = jnp.zeros_like(union_ref)

    # logits_ref: (B, C, TN) native dtype   target_ref: (B, TN) int32
    x = logits_ref[...].astype(jnp.float32)
    if temperature != 1.0:                      # trace-time specialization
        x = x / temperature

    # softmax over the class axis (axis=1), independently per spatial column
    m = jnp.max(x, axis=1, keepdims=True)
    e = jnp.exp(x - m)
    denom = jnp.sum(e, axis=1, keepdims=True)   # (B, 1, TN)
    p = e * pl.reciprocal(denom)                # one reciprocal per column

    b, c, tn = x.shape

    # boolean one-hot of target along the class axis (== torch scatter(dim=1))
    cls = lax.broadcasted_iota(jnp.int32, (1, c, tn), 1)
    onehot = cls == target_ref[...][:, None, :]          # (B, C, TN) bool

    # mask lanes past the true spatial extent (last block may read OOB padding)
    need_edge_mask = (n_total % tile_n) != 0
    if need_edge_mask:
        blk = pl.program_id(0) * tiles_per_part + t
        col = blk * tile_n + lax.broadcasted_iota(jnp.int32, (1, 1, tn), 2)
        valid = col < n_total                             # (1, 1, TN) bool
        onehot = jnp.logical_and(onehot, valid)

    if gamma == 0.0:                # trace-time specialization: factor == 1
        fp = p
        factor_at_target = onehot.astype(jnp.float32)
    else:
        # NOTE: keep jnp.power (matches torch .pow(gamma) semantics at p == 1;
        # do NOT rewrite as exp(gamma*log(1-p))).
        factor = jnp.power(1.0 - p, gamma)
        fp = factor * p
        factor_at_target = jnp.where(onehot, factor, 0.0)

    fp_valid = jnp.where(valid, fp, 0.0) if need_edge_mask else fp

    # partial reductions over this spatial tile -> (B, C)
    inter_ref[...] += jnp.sum(jnp.where(onehot, fp, 0.0), axis=2)
    union_ref[...] += (jnp.sum(fp_valid, axis=2) +
                       jnp.sum(factor_at_target, axis=2))


def _pick_tile_n(n, b, c, in_bytes, max_tile_n, vmem_budget=12 * 1024 * 1024):
    """Largest lane tile (multiple of 128) whose working set fits the budget."""
    if n <= 128:
        return int(n)                 # single full-width block (legal: full dim)
    # double-buffered input blocks + ~6 live f32 (B, C, tile) temporaries
    per_col = 2 * (b * c * in_bytes + 4 * b) + 6 * b * c * 4
    t = min(max_tile_n, max(128, vmem_budget // max(per_col, 1)))
    t = (t // 128) * 128
    t = min(t, (n // 128) * 128)      # never wider than the array itself
    return int(max(128, t))


def soft_dice(logits, target, *, smooth=SMOOTH, gamma=GAMMA,
              temperature=TEMPERATURE, max_tile_n=8192):
    """logits: (B, C, H, W); target: (B, H, W) int class indices.

    smooth / gamma / temperature must be Python scalars (static).
    """
    B, C = logits.shape[0], logits.shape[1]
    logits3 = logits.reshape(B, C, -1)               # keep native dtype (bf16 ok)
    target2 = target.reshape(B, -1).astype(jnp.int32)
    N = logits3.shape[2]

    in_bytes = jnp.dtype(logits3.dtype).itemsize
    tile_n = _pick_tile_n(N, B, C, in_bytes, max_tile_n)

    num_tiles = (N + tile_n - 1) // tile_n
    # 2 partitions so v7x's two TensorCores split the bandwidth-bound reduction.
    P = 2 if (num_tiles >= 2 and num_tiles % 2 == 0) else 1
    T = num_tiles // P

    kernel = functools.partial(
        _softdice_partial_kernel, gamma=float(gamma),
        temperature=float(temperature), n_total=N, tile_n=tile_n,
        tiles_per_part=T)

    cost = pl.CostEstimate(
        flops=10 * B * C * N,
        transcendentals=B * C * N,
        bytes_accessed=B * C * N * in_bytes + B * N * 4 + 2 * P * B * C * 4)

    inter_p, union_p = pl.pallas_call(
        kernel,
        out_shape=(jax.ShapeDtypeStruct((P, B, C), jnp.float32),
                   jax.ShapeDtypeStruct((P, B, C), jnp.float32)),
        grid=(P, T),
        in_specs=[
            pl.BlockSpec((B, C, tile_n), lambda p, t: (0, 0, p * T + t)),
            pl.BlockSpec((B, tile_n), lambda p, t: (0, p * T + t)),
        ],
        out_specs=(
            pl.BlockSpec((None, B, C), lambda p, t: (p, 0, 0)),
            pl.BlockSpec((None, B, C), lambda p, t: (p, 0, 0)),
        ),
        compiler_params=pltpu.CompilerParams(
            dimension_semantics=("parallel", "arbitrary"),
            vmem_limit_bytes=32 * 1024 * 1024),
        cost_estimate=cost,
    )(logits3, target2)

    # tiny finalization in plain JAX (matches the PyTorch forward exactly)
    inter = jnp.sum(inter_p, axis=0)                       # (B, C)
    union = jnp.sum(union_p, axis=0) - inter               # (B, C)
    ratio = (inter + smooth) / (union + smooth)
    per_batch = -jnp.log(jnp.mean(ratio, axis=1))          # (B,)
    return jnp.mean(per_batch)


def soft_dice_ref(logits, target, smooth=SMOOTH, gamma=GAMMA,
                  temperature=TEMPERATURE):
    """Pure-JAX reference mirroring the PyTorch forward exactly."""
    B, C = logits.shape[0], logits.shape[1]
    x = logits.reshape(B, C, -1).astype(jnp.float32) / temperature
    p = jax.nn.softmax(x, axis=1)
    t = target.reshape(B, -1)
    onehot = (t[:, None, :] == jnp.arange(C)[None, :, None]).astype(jnp.float32)
    factor = jnp.power(1.0 - p, gamma)
    inter = jnp.sum(factor * p * onehot, axis=2)
    union = jnp.sum(factor * (p + onehot), axis=2) - inter
    loss = -jnp.log(jnp.mean((inter + smooth) / (union + smooth), axis=1))
    return jnp.mean(loss)


if __name__ == "__main__":
    key = jax.random.PRNGKey(0)

    cases = [
        # (B, C, H, W, gamma, temperature, max_tile_n)
        (2, 4, 16, 16, 0.0, 1.0, 8192),   # default SoftDice() path
        (2, 4, 16, 16, 2.0, 0.7, 8192),   # gamma / temperature path
        (2, 4, 16, 17, 0.0, 1.0, 8192),   # N not a multiple of 128 -> edge mask
        (2, 4, 16, 32, 0.0, 1.0, 128),    # multi-tile accumulation + 2 partitions
    ]
    for idx, (B, C, H, W, gamma, temp, mt) in enumerate(cases):
        k_logits, k_target = jax.random.split(jax.random.fold_in(key, idx))
        logits = jax.random.normal(k_logits, (B, C, H, W), dtype=jnp.float32)
        target = jax.random.randint(k_target, (B, H, W), 0, C, dtype=jnp.int32)

        got = jax.block_until_ready(
            soft_dice(logits, target, gamma=gamma, temperature=temp,
                      max_tile_n=mt))
        want = jax.block_until_ready(
            soft_dice_ref(logits, target, gamma=gamma, temperature=temp))

        assert jnp.isfinite(got), (idx, got)
        assert jnp.allclose(got, want, rtol=1e-5, atol=1e-5), (idx, got, want)

    print("KERNEL_OK")
</pallas_src>

<mosaic_0001>
module attributes {stable_mosaic.version = 11 : i64} {
  func.func @_softdice_partial_kernel(%arg0: i32, %arg1: i32, %arg2: memref<2x4x256xf32, #tpu.memory_space<vmem>>, %arg3: memref<2x256xi32, #tpu.memory_space<vmem>>, %arg4: memref<1x2x4xf32, #tpu.memory_space<vmem>>, %arg5: memref<1x2x4xf32, #tpu.memory_space<vmem>>) attributes {dimension_semantics = [#tpu.dimension_semantics<parallel>, #tpu.dimension_semantics<arbitrary>], iteration_bounds = array<i64: 1, 1>, scalar_prefetch = 0 : i64, scratch_operands = 0 : i64, tpu.core_type = #tpu.core_type<tc>, window_params = [{transform_indices = @transform_0, window_bounds = array<i64: 2, 4, 256>}, {transform_indices = @transform_1, window_bounds = array<i64: 2, 256>}, {transform_indices = @transform_2, window_bounds = array<i64: 1, 2, 4>}, {transform_indices = @transform_3, window_bounds = array<i64: 1, 2, 4>}]} {
    %c0_i32 = arith.constant 0 : i32
    %0 = arith.cmpi eq, %arg1, %c0_i32 : i32
    %1 = arith.extui %0 : i1 to i32
    %c0_i32_0 = arith.constant 0 : i32
    %2 = arith.cmpi ne, %1, %c0_i32_0 : i32
    scf.if %2 {
      %cst_22 = arith.constant 0.000000e+00 : f32
      %40 = vector.broadcast %cst_22 : f32 to vector<2x4xf32>
      %c0_23 = arith.constant 0 : index
      %c0_24 = arith.constant 0 : index
      %c0_25 = arith.constant 0 : index
      %41 = vector.load %arg4[%c0_23, %c0_24, %c0_25] : memref<1x2x4xf32, #tpu.memory_space<vmem>>, vector<1x2x4xf32>
      %42 = vector.shape_cast %41 : vector<1x2x4xf32> to vector<2x4xf32>
      %43 = vector.shape_cast %40 : vector<2x4xf32> to vector<1x2x4xf32>
      tpu.vector_store %arg4[%c0_23, %c0_24, %c0_25], %43 {strides = array<i32>} : memref<1x2x4xf32, #tpu.memory_space<vmem>>, vector<1x2x4xf32>,
      %cst_26 = arith.constant 0.000000e+00 : f32
      %44 = vector.broadcast %cst_26 : f32 to vector<2x4xf32>
      %c0_27 = arith.constant 0 : index
      %c0_28 = arith.constant 0 : index
      %c0_29 = arith.constant 0 : index
      %45 = vector.load %arg5[%c0_27, %c0_28, %c0_29] : memref<1x2x4xf32, #tpu.memory_space<vmem>>, vector<1x2x4xf32>
      %46 = vector.shape_cast %45 : vector<1x2x4xf32> to vector<2x4xf32>
      %47 = vector.shape_cast %44 : vector<2x4xf32> to vector<1x2x4xf32>
      tpu.vector_store %arg5[%c0_27, %c0_28, %c0_29], %47 {strides = array<i32>} : memref<1x2x4xf32, #tpu.memory_space<vmem>>, vector<1x2x4xf32>,
    } else {
    }
    %c0 = arith.constant 0 : index
    %c0_1 = arith.constant 0 : index
    %c0_2 = arith.constant 0 : index
    %3 = vector.load %arg2[%c0, %c0_1, %c0_2] : memref<2x4x256xf32, #tpu.memory_space<vmem>>, vector<2x4x256xf32>
    %cst = arith.constant dense<0xFF800000> : vector<2x256xf32>
    %4 = vector.multi_reduction <maximumf>, %3, %cst [1] : vector<2x4x256xf32> to vector<2x256xf32>
    %5 = vector.shape_cast %4 : vector<2x256xf32> to vector<2x1x256xf32>
    %6 = vector.broadcast %5 : vector<2x1x256xf32> to vector<2x4x256xf32>
    %7 = arith.subf %3, %6 : vector<2x4x256xf32>
    %8 = math.exp %7 : vector<2x4x256xf32>
    %cst_3 = arith.constant dense<0.000000e+00> : vector<2x256xf32>
    %9 = vector.multi_reduction <add>, %8, %cst_3 [1] : vector<2x4x256xf32> to vector<2x256xf32>
    %10 = vector.shape_cast %9 : vector<2x256xf32> to vector<2x1x256xf32>
    %11 = tpu.reciprocal %10 : vector<2x1x256xf32> -> vector<2x1x256xf32>
    %12 = vector.broadcast %11 : vector<2x1x256xf32> to vector<2x4x256xf32>
    %13 = arith.mulf %8, %12 : vector<2x4x256xf32>
    %14 = tpu.iota {dimensions = array<i32: 1>} : vector<1x4x256xi32>
    %c0_4 = arith.constant 0 : index
    %c0_5 = arith.constant 0 : index
    %15 = vector.load %arg3[%c0_4, %c0_5] : memref<2x256xi32, #tpu.memory_space<vmem>>, vector<2x256xi32>
    %16 = vector.shape_cast %15 : vector<2x256xi32> to vector<2x1x256xi32>
    %17 = vector.broadcast %14 : vector<1x4x256xi32> to vector<2x4x256xi32>
    %18 = vector.broadcast %16 : vector<2x1x256xi32> to vector<2x4x256xi32>
    %19 = arith.cmpi eq, %17, %18 : vector<2x4x256xi32>
    %20 = arith.extui %19 : vector<2x4x256xi1> to vector<2x4x256xi32>
    %21 = arith.sitofp %20 : vector<2x4x256xi32> to vector<2x4x256xf32>
    %c0_6 = arith.constant 0 : index
    %c0_7 = arith.constant 0 : index
    %c0_8 = arith.constant 0 : index
    %22 = vector.load %arg4[%c0_6, %c0_7, %c0_8] : memref<1x2x4xf32, #tpu.memory_space<vmem>>, vector<1x2x4xf32>
    %23 = vector.shape_cast %22 : vector<1x2x4xf32> to vector<2x4xf32>
    %cst_9 = arith.constant 0.000000e+00 : f32
    %24 = vector.broadcast %cst_9 : f32 to vector<2x4x256xf32>
    %25 = arith.select %19, %13, %24 : vector<2x4x256xi1>, vector<2x4x256xf32>
    %cst_10 = arith.constant dense<0.000000e+00> : vector<2x4xf32>
    %26 = vector.multi_reduction <add>, %25, %cst_10 [2] : vector<2x4x256xf32> to vector<2x4xf32>
    %27 = arith.addf %23, %26 : vector<2x4xf32>
    %c0_11 = arith.constant 0 : index
    %c0_12 = arith.constant 0 : index
    %c0_13 = arith.constant 0 : index
    %28 = vector.load %arg4[%c0_11, %c0_12, %c0_13] : memref<1x2x4xf32, #tpu.memory_space<vmem>>, vector<1x2x4xf32>
    %29 = vector.shape_cast %28 : vector<1x2x4xf32> to vector<2x4xf32>
    %30 = vector.shape_cast %27 : vector<2x4xf32> to vector<1x2x4xf32>
    tpu.vector_store %arg4[%c0_11, %c0_12, %c0_13], %30 {strides = array<i32>} : memref<1x2x4xf32, #tpu.memory_space<vmem>>, vector<1x2x4xf32>,
    %c0_14 = arith.constant 0 : index
    %c0_15 = arith.constant 0 : index
    %c0_16 = arith.constant 0 : index
    %31 = vector.load %arg5[%c0_14, %c0_15, %c0_16] : memref<1x2x4xf32, #tpu.memory_space<vmem>>, vector<1x2x4xf32>
    %32 = vector.shape_cast %31 : vector<1x2x4xf32> to vector<2x4xf32>
    %cst_17 = arith.constant dense<0.000000e+00> : vector<2x4xf32>
    %33 = vector.multi_reduction <add>, %13, %cst_17 [2] : vector<2x4x256xf32> to vector<2x4xf32>
    %cst_18 = arith.constant dense<0.000000e+00> : vector<2x4xf32>
    %34 = vector.multi_reduction <add>, %21, %cst_18 [2] : vector<2x4x256xf32> to vector<2x4xf32>
    %35 = arith.addf %33, %34 : vector<2x4xf32>
    %36 = arith.addf %32, %35 : vector<2x4xf32>
    %c0_19 = arith.constant 0 : index
    %c0_20 = arith.constant 0 : index
    %c0_21 = arith.constant 0 : index
    %37 = vector.load %arg5[%c0_19, %c0_20, %c0_21] : memref<1x2x4xf32, #tpu.memory_space<vmem>>, vector<1x2x4xf32>
    %38 = vector.shape_cast %37 : vector<1x2x4xf32> to vector<2x4xf32>
    %39 = vector.shape_cast %36 : vector<2x4xf32> to vector<1x2x4xf32>
    tpu.vector_store %arg5[%c0_19, %c0_20, %c0_21], %39 {strides = array<i32>} : memref<1x2x4xf32, #tpu.memory_space<vmem>>, vector<1x2x4xf32>,
    return
  }
  func.func @transform_0(%arg0: i32, %arg1: i32) -> (i32, i32, i32) {
    %c1_i32 = arith.constant 1 : i32
    %0 = arith.muli %arg0, %c1_i32 : i32
    %1 = arith.addi %0, %arg1 : i32
    %c0_i32 = arith.constant 0 : i32
    %c0_i32_0 = arith.constant 0 : i32
    %c0_i32_1 = arith.constant 0 : i32
    return %c0_i32, %c0_i32_0, %1 : i32, i32, i32
  }
  func.func @transform_1(%arg0: i32, %arg1: i32) -> (i32, i32) {
    %c1_i32 = arith.constant 1 : i32
    %0 = arith.muli %arg0, %c1_i32 : i32
    %1 = arith.addi %0, %arg1 : i32
    %c0_i32 = arith.constant 0 : i32
    %c0_i32_0 = arith.constant 0 : i32
    return %c0_i32, %1 : i32, i32
  }
  func.func @transform_2(%arg0: i32, %arg1: i32) -> (i32, i32, i32) {
    %c0_i32 = arith.constant 0 : i32
    %c0_i32_0 = arith.constant 0 : i32
    %c0_i32_1 = arith.constant 0 : i32
    return %arg0, %c0_i32, %c0_i32_0 : i32, i32, i32
  }
  func.func @transform_3(%arg0: i32, %arg1: i32) -> (i32, i32, i32) {
    %c0_i32 = arith.constant 0 : i32
    %c0_i32_0 = arith.constant 0 : i32
    %c0_i32_1 = arith.constant 0 : i32
    return %arg0, %c0_i32, %c0_i32_0 : i32, i32, i32
  }
}

</mosaic_0001>

<llo_original>
// kernel: tpu_custom_call.1
$region0: #{tpu_custom_call.1}
  #allocation0 [shape = 'u32[]', space=smem, size = 0x4, offset = 0x4, fixed_abs, tag = 'smem constant byte address 0x4 - core index']
  #allocation1 [shape = 'u32[72,128]{1,0:T(1,128)}', space=vmem, size = 0x9000, scoped, tag = 'internal scratch']
  %s0 = inlined_call_operand.hbm [shape: f32[2,4,256], index: 0, kind: input, shape index: {}]
  %s1 = inlined_call_operand.hbm [shape: s32[2,256], index: 1, kind: input, shape index: {}]
  %s2 = inlined_call_operand.hbm [shape: f32[1,2,4], index: 2, kind: output, shape index: {0}]
  %s3 = inlined_call_operand.hbm [shape: f32[1,2,4], index: 3, kind: output, shape index: {1}]
  %4 = xla_tuple %s2, %s3
  %s5 = sld [smem:[#allocation0]]
  $region38: #{tpu_custom_call.1} parent=0
    _
  %s7 = ssub.s32 1, %s5
  %s8 = scalar_select 0, %s7, %s5
  $region1: #{tpu_custom_call.1} parent=0
    #allocation2 [shape = 'u8[8192]{0}', space=vmem, size = 0x2000, scoped, tag = 'input window, operand 0, single buffered']
    #allocation3 [shape = 's32[1]{0}', space=sflag, size = 0x4, scoped, tag = 'scoped memory for tpu_custom_call.1']
    #allocation4 [shape = 's32[1]{0}', space=sflag, size = 0x4, scoped, tag = 'scoped memory for tpu_custom_call.1']
    #allocation5 [shape = 'u8[2048]{0}', space=vmem, size = 0x800, scoped, tag = 'input window, operand 1, single buffered']
    #allocation6 [shape = 's32[1]{0}', space=sflag, size = 0x4, scoped, tag = 'scoped memory for tpu_custom_call.1']
    #allocation7 [shape = 'u8[1024]{0}', space=vmem, size = 0x400, scoped, tag = 'output window, operand 0, single buffered']
    #allocation8 [shape = 'u8[1024]{0}', space=vmem, size = 0x400, scoped, tag = 'output window, operand 1, single buffered']
    #allocation9 [shape = 's32[1]{0}', space=sflag, size = 0x4, scoped, tag = 'scoped memory for tpu_custom_call.1']
    %9 = vsyncpa [#allocation3], 0
    %10 = vsyncpa [#allocation6], 0
    %11 = vsyncpa [#allocation4], 0
    %12 = vsyncpa [#allocation9], 0
    // Predicated region
    $region2: #{tpu_custom_call.1} parent=1 // pred_check
      _
    $region3: #{tpu_custom_call.1} parent=1 // pred_check_branch
      %14 = sbr.rel (0) target = $region5
    $region4: #{tpu_custom_call.1} parent=1 // pred_region
      %s15 = sadd.s32 0, 0
      %s16 = smul.u32 2, %s15
      %18 = vsyncadd [#allocation3], 0
      %s19 = smul.addr %s16, 4
      %s20 = scalar_lea.hbm %s0, %s19
      %s21 = sshll.u32 %s20, 4
      %s22 = int_to_ptr.hbm [resolvable:$true] %s21
      %s23 = sshll.u32 [#allocation2], 4
      %s24 = int_to_ptr.vmem [resolvable:$true] %s23
      %29 = dma.hbm_to_vmem [thread:$0]  %s22, 256, %s24, [#allocation3], 128, 128, 8
    $region5: #{tpu_custom_call.1} parent=1 // pred_fallthru
      _
    // Predicated region
    $region6: #{tpu_custom_call.1} parent=1 // pred_check
      _
    $region7: #{tpu_custom_call.1} parent=1 // pred_check_branch
      %31 = sbr.rel (0) target = $region9
    $region8: #{tpu_custom_call.1} parent=1 // pred_region
      %s32 = sadd.s32 0, 0
      %s33 = smul.u32 2, %s32
      %35 = vsyncadd [#allocation6], 0
      %s36 = smul.addr %s33, 2
      %s37 = scalar_lea.hbm %s1, %s36
      %s39 = sshll.u32 %s37, 4
      %s40 = int_to_ptr.hbm [resolvable:$true] %s39
      %s41 = sshll.u32 [#allocation5], 4
      %s42 = int_to_ptr.vmem [resolvable:$true] %s41
      %44 = dma.hbm_to_vmem [thread:$0]  %s40, 64, %s42, [#allocation6]
    $region9: #{tpu_custom_call.1} parent=1 // pred_fallthru
      _
    // Predicated region
    $region10: #{tpu_custom_call.1} parent=1 // pred_check
      _
    $region11: #{tpu_custom_call.1} parent=1 // pred_check_branch
      %46 = sbr.rel (0) target = $region13
    $region12: #{tpu_custom_call.1} parent=1 // pred_region
      %48 = dma.done [#allocation3], 256
    $region13: #{tpu_custom_call.1} parent=1 // pred_fallthru
      _
    // Predicated region
    $region14: #{tpu_custom_call.1} parent=1 // pred_check
      _
    $region15: #{tpu_custom_call.1} parent=1 // pred_check_branch
      %50 = sbr.rel (0) target = $region17
    $region16: #{tpu_custom_call.1} parent=1 // pred_region
      %52 = dma.done [#allocation6], 64
    $region17: #{tpu_custom_call.1} parent=1 // pred_fallthru
      _
    %s53 = sadd.s32 0, 0
    %s54 = smul.u32 2, %s53
    %s55 = sadd.s32 0, 0
    %s56 = smul.u32 2, %s55
    %p57 = scmp.eq.s32.totalorder 0, 0
    // Predicated region
    $region18: #{tpu_custom_call.1} parent=1 // pred_check
      %p58 = pneg %p57
    $region19: #{tpu_custom_call.1} parent=1 // pred_check_branch
      %60 = sbr.rel (%p58) target = $region21
    $region20: #{tpu_custom_call.1} parent=1 // pred_region
      %vm61 = vcmask 25600
      %62 = vst.msk [vmem:[#allocation7] sm:$0x3] %vm61, 0.0
      %63 = vst.msk [vmem:[#allocation8] sm:$0x3] %vm61, 0.0
    $region21: #{tpu_custom_call.1} parent=1 // pred_fallthru
      _
    %v64 = vld [vmem:[#allocation2] sm:$0xff]
    %v65 = vld [vmem:[#allocation2 + $0x8] sm:$0xff]
    %68 = vst [vmem:[#allocation1] ss:$2 sm:$0xff] %v64
    %v69 = vld.sshfl [vmem:[#allocation1] sm:$0xff pattern:$0x75316420]
    %v70 = vld.sshfl [vmem:[#allocation1 + $0x8] sm:$0xff pattern:$0x75316420]
    %s71 = scalar_lea.vmem [#allocation1], 16
    %72 = vst [vmem:[%s71] ss:$2 sm:$0xff] %v65
    %v73 = vld.sshfl [vmem:[#allocation1 + $0x10] sm:$0xff pattern:$0x75316420]
    %v74 = vld.sshfl [vmem:[#allocation1 + $0x18] sm:$0xff pattern:$0x75316420]
    %vm79 = vcmask 1043456
    %v80 = vsel %vm79, %v69, -inf
    %v81 = vrot.slane %v80, 4
    %v82 = vmax.f32 %v80, %v81
    %v83 = vrot.slane %v82, 2
    %v84 = vmax.f32 %v82, %v83
    %v85 = vrot.slane %v84, 1
    %v86 = vmax.f32 %v84, %v85
    %v87 = vsel %vm79, %v70, -inf
    %v88 = vrot.slane %v87, 4
    %v89 = vmax.f32 %v87, %v88
    %v90 = vrot.slane %v89, 2
    %v91 = vmax.f32 %v89, %v90
    %v92 = vrot.slane %v91, 1
    %v93 = vmax.f32 %v91, %v92
    %v94 = vsel %vm79, %v73, -inf
    %v95 = vrot.slane %v94, 4
    %v96 = vmax.f32 %v94, %v95
    %v97 = vrot.slane %v96, 2
    %v98 = vmax.f32 %v96, %v97
    %v99 = vrot.slane %v98, 1
    %v100 = vmax.f32 %v98, %v99
    %v101 = vsel %vm79, %v74, -inf
    %v102 = vrot.slane %v101, 4
    %v103 = vmax.f32 %v101, %v102
    %v104 = vrot.slane %v103, 2
    %v105 = vmax.f32 %v103, %v104
    %v106 = vrot.slane %v105, 1
    %v107 = vmax.f32 %v105, %v106
    %v112 = vrot.slane %v93, 4
    %v113 = vrot.slane %v107, 4
    %v114 = vsel %vm79, %v86, %v112
    %v115 = vsel %vm79, %v100, %v113
    %v118 = vsub.f32 %v64, %v114
    %v119 = vsub.f32 %v65, %v115
    %v120 = vmul.f32 %v118, 1.442695
    %v121 = vpow.pop %v120
    %v122 = vmul.f32 %v119, 1.442695
    %v123 = vpow.pop %v122
    %126 = vst [vmem:[#allocation1] ss:$2 sm:$0xff] %v121
    %v127 = vld.sshfl [vmem:[#allocation1] sm:$0xff pattern:$0x75316420]
    %v128 = vld.sshfl [vmem:[#allocation1 + $0x8] sm:$0xff pattern:$0x75316420]
    %s129 = scalar_lea.vmem [#allocation1], 16
    %130 = vst [vmem:[%s129] ss:$2 sm:$0xff] %v123
    %v131 = vld.sshfl [vmem:[#allocation1 + $0x10] sm:$0xff pattern:$0x75316420]
    %v132 = vld.sshfl [vmem:[#allocation1 + $0x18] sm:$0xff pattern:$0x75316420]
    %v137 = vsel %vm79, %v127, 0.0
    %v138 = vrot.slane %v137, 4
    %v139 = vadd.f32 %v137, %v138
    %v140 = vrot.slane %v139, 2
    %v141 = vadd.f32 %v139, %v140
    %v142 = vrot.slane %v141, 1
    %v143 = vadd.f32 %v141, %v142
    %v144 = vsel %vm79, %v128, 0.0
    %v145 = vrot.slane %v144, 4
    %v146 = vadd.f32 %v144, %v145
    %v147 = vrot.slane %v146, 2
    %v148 = vadd.f32 %v146, %v147
    %v149 = vrot.slane %v148, 1
    %v150 = vadd.f32 %v148, %v149
    %v151 = vsel %vm79, %v131, 0.0
    %v152 = vrot.slane %v151, 4
    %v153 = vadd.f32 %v151, %v152
    %v154 = vrot.slane %v153, 2
    %v155 = vadd.f32 %v153, %v154
    %v156 = vrot.slane %v155, 1
    %v157 = vadd.f32 %v155, %v156
    %v158 = vsel %vm79, %v132, 0.0
    %v159 = vrot.slane %v158, 4
    %v160 = vadd.f32 %v158, %v159
    %v161 = vrot.slane %v160, 2
    %v162 = vadd.f32 %v160, %v161
    %v163 = vrot.slane %v162, 1
    %v164 = vadd.f32 %v162, %v163
    %v165 = vrcp.pop %v143
    %v166 = vmul.f32 %v143, %v165
    %v167 = vsub.f32 1.0, %v166
    %v168 = vmul.f32 %v165, %v167
    %v169 = vadd.f32 %v165, %v168
    %vm170 = vweird.f32 %v143
    %vm171 = vweird.f32 %v165
    %vm172 = vmor %vm170, %vm171
    %v173 = vsel %vm172, %v165, %v169
    %v174 = vand.u32 2147483647, %v143
    %vm175 = vcmp.eq.f32.partialorder %v174, 8.507059e+37
    %v176 = vand.u32 %v143, 2147483648
    %v177 = vor.u32 1.1754944e-38, %v176
    %v178 = vsel %vm175, %v177, %v173
    %v179 = vrcp.pop %v150
    %v180 = vmul.f32 %v150, %v179
    %v181 = vsub.f32 1.0, %v180
    %v182 = vmul.f32 %v179, %v181
    %v183 = vadd.f32 %v179, %v182
    %vm184 = vweird.f32 %v150
    %vm185 = vweird.f32 %v179
    %vm186 = vmor %vm184, %vm185
    %v187 = vsel %vm186, %v179, %v183
    %v188 = vand.u32 2147483647, %v150
    %vm189 = vcmp.eq.f32.partialorder %v188, 8.507059e+37
    %v190 = vand.u32 %v150, 2147483648
    %v191 = vor.u32 1.1754944e-38, %v190
    %v192 = vsel %vm189, %v191, %v187
    %v193 = vrcp.pop %v157
    %v194 = vmul.f32 %v157, %v193
    %v195 = vsub.f32 1.0, %v194
    %v196 = vmul.f32 %v193, %v195
    %v197 = vadd.f32 %v193, %v196
    %vm198 = vweird.f32 %v157
    %vm199 = vweird.f32 %v193
    %vm200 = vmor %vm198, %vm199
    %v201 = vsel %vm200, %v193, %v197
    %v202 = vand.u32 2147483647, %v157
    %vm203 = vcmp.eq.f32.partialorder %v202, 8.507059e+37
    %v204 = vand.u32 %v157, 2147483648
    %v205 = vor.u32 1.1754944e-38, %v204
    %v206 = vsel %vm203, %v205, %v201
    %v207 = vrcp.pop %v164
    %v208 = vmul.f32 %v164, %v207
    %v209 = vsub.f32 1.0, %v208
    %v210 = vmul.f32 %v207, %v209
    %v211 = vadd.f32 %v207, %v210
    %vm212 = vweird.f32 %v164
    %vm213 = vweird.f32 %v207
    %vm214 = vmor %vm212, %vm213
    %v215 = vsel %vm214, %v207, %v211
    %v216 = vand.u32 2147483647, %v164
    %vm217 = vcmp.eq.f32.partialorder %v216, 8.507059e+37
    %v218 = vand.u32 %v164, 2147483648
    %v219 = vor.u32 1.1754944e-38, %v218
    %v220 = vsel %vm217, %v219, %v215
    %v225 = vrot.slane %v192, 4
    %v226 = vrot.slane %v220, 4
    %v227 = vsel %vm79, %v178, %v225
    %v228 = vsel %vm79, %v206, %v226
    %v231 = vmul.f32 %v121, %v227
    %v232 = vmul.f32 %v123, %v228
    %v233 = vlaneseq
    %v234 = vshrl.u32 %v233, 7
    %v235 = vld [vmem:[#allocation5] sm:$0xf]
    %v236 = vrot.slane %v235, 1
    %v237 = vrot.slane %v235, 2
    %v238 = vrot.slane %v235, 3
    %vm239 = vcmask 1040384
    %v240 = vsel %vm239, %v235, %v236
    %vm241 = vcmask 1042434
    %v242 = vsel %vm241, %v237, %v238
    %vm243 = vcmask 1041408
    %v244 = vsel %vm243, %v240, %v242
    %vm245 = vcmask 1041409
    %v246 = vsel %vm245, %v235, %v236
    %vm247 = vcmask 1043459
    %v248 = vsel %vm247, %v237, %v238
    %vm249 = vcmask 1042433
    %v250 = vsel %vm249, %v246, %v248
    %v251 = vrot.slane %v250, 1
    %v252 = vperm.slane %v244, 0
    %v253 = vperm.slane %v244, 1
    %v254 = vperm.slane %v251, 0
    %v255 = vperm.slane %v251, 1
    %vm256 = vcmp.eq.s32.totalorder %v234, %v252
    %vm257 = vcmp.eq.s32.totalorder %v234, %v253
    %vm258 = vcmp.eq.s32.totalorder %v234, %v254
    %vm259 = vcmp.eq.s32.totalorder %v234, %v255
    %v260 = vsel %vm256, 1, 0
    %v261 = vsel %vm257, 1, 0
    %v262 = vsel %vm258, 1, 0
    %v263 = vsel %vm259, 1, 0
    %v264 = vcvt.s32.f32 %v260
    %v265 = vcvt.s32.f32 %v261
    %v266 = vcvt.s32.f32 %v262
    %v267 = vcvt.s32.f32 %v263
    %v268 = vld [vmem:[#allocation7] sm:$0x3]
    %271 = vst [vmem:[#allocation1] ss:$2 sm:$0xff] %v231
    %v272 = vld.sshfl [vmem:[#allocation1] sm:$0xff pattern:$0x75316420]
    %v273 = vld.sshfl [vmem:[#allocation1 + $0x8] sm:$0xff pattern:$0x75316420]
    %s274 = scalar_lea.vmem [#allocation1], 16
    %275 = vst [vmem:[%s274] ss:$2 sm:$0xff] %v232
    %v276 = vld.sshfl [vmem:[#allocation1 + $0x10] sm:$0xff pattern:$0x75316420]
    %v277 = vld.sshfl [vmem:[#allocation1 + $0x18] sm:$0xff pattern:$0x75316420]
    %v282 = vsel %vm256, %v272, 0.0
    %v283 = vsel %vm257, %v273, 0.0
    %v284 = vsel %vm258, %v276, 0.0
    %v285 = vsel %vm259, %v277, 0.0
    %v286 = vsel %vm79, %v282, 0.0
    %v287 = vsel %vm79, %v283, 0.0
    %v288 = vadd.f32 %v286, %v287
    %289 = vadd.xlane.f32.xlu0 %v288
    %v290 = vpop.xlane.xlu0 %289
    %v291 = vsel %vm79, %v284, 0.0
    %v292 = vsel %vm79, %v285, 0.0
    %v293 = vadd.f32 %v291, %v292
    %294 = vadd.xlane.f32.xlu0 %v293
    %v295 = vpop.xlane.xlu0 %294
    %v298 = vlaneseq
    %v299 = vand.u32 %v298, 127
    %v300 = vperm.slane %v290, %v299
    %v301 = vperm.slane %v295, %v299
    %v302 = vsel %vm245, %v301, %v300
    %v304 = vadd.f32 %v268, %v302
    %vm305 = vcmask 25600
    %306 = vst.msk [vmem:[#allocation7] sm:$0x3] %vm305, %v304
    %v307 = vld [vmem:[#allocation8] sm:$0x3]
    %308 = vst [vmem:[#allocation1] ss:$2 sm:$0xff] %v231
    %v309 = vld.sshfl [vmem:[#allocation1] sm:$0xff pattern:$0x75316420]
    %v310 = vld.sshfl [vmem:[#allocation1 + $0x8] sm:$0xff pattern:$0x75316420]
    %s311 = scalar_lea.vmem [#allocation1], 16
    %312 = vst [vmem:[%s311] ss:$2 sm:$0xff] %v232
    %v313 = vld.sshfl [vmem:[#allocation1 + $0x10] sm:$0xff pattern:$0x75316420]
    %v314 = vld.sshfl [vmem:[#allocation1 + $0x18] sm:$0xff pattern:$0x75316420]
    %v319 = vsel %vm79, %v309, 0.0
    %v320 = vsel %vm79, %v310, 0.0
    %v321 = vadd.f32 %v319, %v320
    %322 = vadd.xlane.f32.xlu0 %v321
    %v323 = vpop.xlane.xlu0 %322
    %v324 = vsel %vm79, %v313, 0.0
    %v325 = vsel %vm79, %v314, 0.0
    %v326 = vadd.f32 %v324, %v325
    %327 = vadd.xlane.f32.xlu0 %v326
    %v328 = vpop.xlane.xlu0 %327
    %v329 = vsel %vm79, %v264, 0.0
    %v330 = vsel %vm79, %v265, 0.0
    %v331 = vadd.f32 %v329, %v330
    %332 = vadd.xlane.f32.xlu0 %v331
    %v333 = vpop.xlane.xlu0 %332
    %v334 = vsel %vm79, %v266, 0.0
    %v335 = vsel %vm79, %v267, 0.0
    %v336 = vadd.f32 %v334, %v335
    %337 = vadd.xlane.f32.xlu0 %v336
    %v338 = vpop.xlane.xlu0 %337
    %v339 = vadd.f32 %v323, %v333
    %v340 = vadd.f32 %v328, %v338
    %v343 = vperm.slane %v339, %v299
    %v344 = vperm.slane %v340, %v299
    %v345 = vsel %vm245, %v344, %v343
    %v347 = vadd.f32 %v307, %v345
    %348 = vst.msk [vmem:[#allocation8] sm:$0x3] %vm305, %v347
    // Predicated region
    $region22: #{tpu_custom_call.1} parent=1 // pred_check
      _
    $region23: #{tpu_custom_call.1} parent=1 // pred_check_branch
      %350 = sbr.rel (0) target = $region25
    $region24: #{tpu_custom_call.1} parent=1 // pred_region
      %352 = vsyncadd [#allocation4], 0
      %s354 = sshll.u32 [#allocation7], 4
      %s355 = int_to_ptr.vmem [resolvable:$true] %s354
      %s356 = sshll.u32 %s2, 4
      %s357 = int_to_ptr.hbm [resolvable:$true] %s356
      %359 = dma.vmem_to_hbm [thread:$0]  %s355, 32, %s357, [#allocation4]
    $region25: #{tpu_custom_call.1} parent=1 // pred_fallthru
      _
    // Predicated region
    $region26: #{tpu_custom_call.1} parent=1 // pred_check
      _
    $region27: #{tpu_custom_call.1} parent=1 // pred_check_branch
      %361 = sbr.rel (0) target = $region29
    $region28: #{tpu_custom_call.1} parent=1 // pred_region
      %363 = vsyncadd [#allocation9], 0
      %s365 = sshll.u32 [#allocation8], 4
      %s366 = int_to_ptr.vmem [resolvable:$true] %s365
      %s367 = sshll.u32 %s3, 4
      %s368 = int_to_ptr.hbm [resolvable:$true] %s367
      %370 = dma.vmem_to_hbm [thread:$0]  %s366, 32, %s368, [#allocation9]
    $region29: #{tpu_custom_call.1} parent=1 // pred_fallthru
      _
    // Predicated region
    $region30: #{tpu_custom_call.1} parent=1 // pred_check
      _
    $region31: #{tpu_custom_call.1} parent=1 // pred_check_branch
      %372 = sbr.rel (0) target = $region33
    $region32: #{tpu_custom_call.1} parent=1 // pred_region
      %374 = dma.done [#allocation4], 32
    $region33: #{tpu_custom_call.1} parent=1 // pred_fallthru
      _
    // Predicated region
    $region34: #{tpu_custom_call.1} parent=1 // pred_check
      _
    $region35: #{tpu_custom_call.1} parent=1 // pred_check_branch
      %376 = sbr.rel (0) target = $region37
    $region36: #{tpu_custom_call.1} parent=1 // pred_region
      %378 = dma.done [#allocation9], 32
    $region37: #{tpu_custom_call.1} parent=1 // pred_fallthru
      _
    %379 = vsyncpa [#allocation3], 1
    %380 = vsyncpa [#allocation6], 1
    %381 = vsyncpa [#allocation4], 1
    %382 = vsyncpa [#allocation9], 1

</llo_original>
